<compile_context>
chip_gen: v6e
topology: v6e:2x2x1
jax: 0.10.0
libtpu: 0.0.40
codegen_flags: <defaults>
</compile_context>

<pallas_src>
import functools
import math

import jax
import jax.numpy as jnp
from jax import lax
from jax.experimental import pallas as pl
from jax.experimental.pallas import tpu as pltpu


def _round_up(x, m):
    return (x + m - 1) // m * m


def _cross_attn_kernel(fw_ref,        # SMEM (L,)       fusion_weights / L  (scalar prefetch)
                       xq_ref,        # VMEM (1,1,C,TQ) query-stream tile (stream i)
                       xkv_ref,       # VMEM (1,1,C,TK) key/value-stream tile (stream (i+1)%L)
                       wq_ref,        # VMEM (CQK, C)   bf16 query weights (zero-padded rows)
                       wkv_ref,       # VMEM (CQK+C, C) bf16 fused [Wk; Wv] weights
                       bq_ref,        # VMEM (CQK, 1)   f32 query bias
                       bkv_ref,       # VMEM (CQK+C, 1) f32 fused [bk; bv] bias
                       o_ref,         # VMEM (1, C, TQ) f32 output accumulator block
                       q_scr,         # VMEM (CQK, TQ)  bf16  Q projection of stream i
                       m_scr,         # VMEM (1, TQ)    f32   online-softmax running max
                       l_scr,         # VMEM (1, TQ)    f32   online-softmax running sum
                       acc_scr,       # VMEM (C, TQ)    f32   unnormalized cross-feature acc
                       *, cqk, n_valid, n_padded):
    i = pl.program_id(2)              # stream index (query stream)
    kj = pl.program_id(3)             # key-tile index
    nk = pl.num_programs(3)
    tk = xkv_ref.shape[3]

    @pl.when((i == 0) & (kj == 0))
    def _init_out():
        o_ref[...] = jnp.zeros_like(o_ref)

    @pl.when(kj == 0)
    def _init_stream():
        # Fresh online-softmax state + Q projection for (batch, q-tile, stream i).
        m_scr[...] = jnp.full_like(m_scr, -1e30)
        l_scr[...] = jnp.zeros_like(l_scr)
        acc_scr[...] = jnp.zeros_like(acc_scr)
        q = jnp.dot(wq_ref[...], xq_ref[0, 0],
                    preferred_element_type=jnp.float32) + bq_ref[...]
        q_scr[...] = q.astype(q_scr.dtype)

    # Fused K/V projection of this key tile of stream (i+1)%L (bf16 MXU, f32 acc).
    kv = jnp.dot(wkv_ref[...], xkv_ref[0, 0],
                 preferred_element_type=jnp.float32) + bkv_ref[...]
    k = kv[:cqk].astype(jnp.bfloat16)            # (CQK, TK)
    v = kv[cqk:].astype(jnp.bfloat16)            # (C,   TK)

    # energy^T[k_pos, q_pos] = sum_c k[c, k_pos] * q[c, q_pos]  -> (TK, TQ)
    # (keys in sublanes, queries in lanes: softmax stats stay in (1, TQ) row
    #  layout and no transposes are needed anywhere in the kernel)
    energy = lax.dot_general(k, q_scr[...], (((0,), (0,)), ((), ())),
                             preferred_element_type=jnp.float32)

    if n_valid < n_padded:
        # Mask padded key positions (zero-padded inputs still pick up the bias).
        key_pos = kj * tk + lax.broadcasted_iota(jnp.int32, energy.shape, 0)
        energy = jnp.where(key_pos < n_valid, energy, -1e30)

    # Online softmax over the key axis (axis 0), all in f32.
    m_old = m_scr[...]                                             # (1, TQ)
    m_new = jnp.maximum(m_old, jnp.max(energy, axis=0, keepdims=True))
    alpha = jnp.exp(m_old - m_new)                                 # (1, TQ)
    p = jnp.exp(energy - m_new)                                    # (TK, TQ) f32
    l_scr[...] = alpha * l_scr[...] + jnp.sum(p, axis=0, keepdims=True)
    m_scr[...] = m_new

    # cross[c, q_pos] = sum_k v[c, k] * p[k, q_pos]  (plain NN bf16 matmul)
    cross = jnp.dot(v, p.astype(jnp.bfloat16),
                    preferred_element_type=jnp.float32)            # (C, TQ)
    acc_scr[...] = acc_scr[...] * alpha + cross

    @pl.when(kj == nk - 1)
    def _finalize_stream():
        # Exact reciprocal (runs once per stream per q-tile; negligible cost).
        o_ref[0] = o_ref[0] + acc_scr[...] * (fw_ref[i] / l_scr[...])


def advanced_cross_stream_attention(streams, params, *, tq=128, tk=128):
    """streams: list of L arrays shaped (B, C, T, J) (or (B, C, T) / (B, C),
    expanded like the torch forward). Returns (B, C, T, J) in float32."""
    fixed = []
    for s in streams:
        if s.ndim == 3:
            s = s[..., None]
        elif s.ndim == 2:
            s = s[..., None, None]
        fixed.append(s)
    streams = fixed

    L = len(streams)
    B, C, T, J = streams[0].shape
    if C < 8:
        raise ValueError("AdvancedCrossStreamAttention requires channels >= 8")
    N = T * J
    NP = _round_up(N, math.lcm(tq, tk))          # lane-dense spatial padding
    C8 = C // 8
    CQK = _round_up(max(C8, 1), 16)              # bf16 sublane-tile aligned head dim

    # NCHW -> (B, C, N), zero-pad spatial to NP, stack streams, cast to bf16.
    def prep(s):
        s = s.reshape(B, C, N)
        if NP != N:
            s = jnp.pad(s, ((0, 0), (0, 0), (0, NP - N)))
        return s

    x = jnp.stack([prep(s) for s in streams], axis=0).astype(jnp.bfloat16)

    # Q weights (zero-padded rows) and fused [Wk; Wv] weights, bf16 for the MXU.
    wq = jnp.pad(params["wq"], ((0, CQK - C8), (0, 0))).astype(jnp.bfloat16)
    wkv = jnp.concatenate(
        [jnp.pad(params["wk"], ((0, CQK - C8), (0, 0))), params["wv"]], axis=0
    ).astype(jnp.bfloat16)
    bq = jnp.pad(params["bq"], (0, CQK - C8)).astype(jnp.float32).reshape(CQK, 1)
    bkv = jnp.concatenate(
        [jnp.pad(params["bk"], (0, CQK - C8)), params["bv"]]
    ).astype(jnp.float32).reshape(CQK + C, 1)
    fw = params["fw"].astype(jnp.float32) / L    # fold the 1/L mean into the weights

    NQT = NP // tq
    NKT = NP // tk
    grid = (B, NQT, L, NKT)

    kernel = functools.partial(_cross_attn_kernel, cqk=CQK, n_valid=N, n_padded=NP)

    out = pl.pallas_call(
        kernel,
        out_shape=jax.ShapeDtypeStruct((B, C, NP), jnp.float32),
        grid_spec=pltpu.PrefetchScalarGridSpec(
            num_scalar_prefetch=1,
            grid=grid,
            in_specs=[
                # query-stream tile: stream i, batch b, query tile qi
                pl.BlockSpec((1, 1, C, tq),
                             lambda b, qi, i, kj, _fw: (i, b, 0, qi)),
                # key/value-stream tile: stream (i+1)%L, batch b, key tile kj
                pl.BlockSpec((1, 1, C, tk),
                             lambda b, qi, i, kj, _fw: ((i + 1) % L, b, 0, kj)),
                pl.BlockSpec((CQK, C), lambda b, qi, i, kj, _fw: (0, 0)),
                pl.BlockSpec((CQK + C, C), lambda b, qi, i, kj, _fw: (0, 0)),
                pl.BlockSpec((CQK, 1), lambda b, qi, i, kj, _fw: (0, 0)),
                pl.BlockSpec((CQK + C, 1), lambda b, qi, i, kj, _fw: (0, 0)),
            ],
            out_specs=pl.BlockSpec((1, C, tq),
                                   lambda b, qi, i, kj, _fw: (b, 0, qi)),
            scratch_shapes=[
                pltpu.VMEM((CQK, tq), jnp.bfloat16),   # Q projection of stream i
                pltpu.VMEM((1, tq), jnp.float32),      # running max
                pltpu.VMEM((1, tq), jnp.float32),      # running sum
                pltpu.VMEM((C, tq), jnp.float32),      # unnormalized cross-feat acc
            ],
        ),
        compiler_params=pltpu.CompilerParams(
            dimension_semantics=("parallel", "parallel", "arbitrary", "arbitrary"),
            vmem_limit_bytes=48 * 1024 * 1024,
        ),
    )(fw, x, x, wq, wkv, bq, bkv)

    return out[:, :, :N].reshape(B, C, T, J)


def reference_jax(streams_nchw, params):
    """Plain-JAX (f32) port of the PyTorch forward for correctness checking."""
    L = len(streams_nchw)
    B, C, T, J = streams_nchw[0].shape
    N = T * J
    outs = []
    for i in range(L):
        xi = streams_nchw[i].reshape(B, C, N)
        xj = streams_nchw[(i + 1) % L].reshape(B, C, N)
        q = jnp.einsum("oc,bcn->bon", params["wq"], xi) + params["bq"][None, :, None]
        k = jnp.einsum("oc,bcn->bon", params["wk"], xj) + params["bk"][None, :, None]
        v = jnp.einsum("oc,bcn->bon", params["wv"], xj) + params["bv"][None, :, None]
        energy = jnp.einsum("bcp,bcq->bpq", q, k)
        attn = jax.nn.softmax(energy, axis=-1)
        cross = jnp.einsum("bcq,bpq->bcp", v, attn).reshape(B, C, T, J)
        outs.append(cross * params["fw"][i])
    return jnp.mean(jnp.stack(outs), axis=0)


if __name__ == "__main__":
    L = 3

    def make_case(key, B, C, T, J):
        k_streams, k_wq, k_wk, k_wv, k_bq, k_bk, k_bv = jax.random.split(key, 7)
        C8 = C // 8
        streams = [
            jax.random.normal(jax.random.fold_in(k_streams, i), (B, C, T, J),
                              jnp.float32)
            for i in range(L)
        ]
        params = {
            "wq": jax.random.normal(k_wq, (C8, C), jnp.float32) * 0.2,
            "wk": jax.random.normal(k_wk, (C8, C), jnp.float32) * 0.2,
            "wv": jax.random.normal(k_wv, (C, C), jnp.float32) * 0.2,
            "bq": jax.random.normal(k_bq, (C8,), jnp.float32) * 0.1,
            "bk": jax.random.normal(k_bk, (C8,), jnp.float32) * 0.1,
            "bv": jax.random.normal(k_bv, (C,), jnp.float32) * 0.1,
            # nn.Parameter(torch.ones(3)) at init; use non-uniform values so the
            # per-stream weighting path is actually exercised.
            "fw": jnp.array([1.0, 0.8, 1.2], jnp.float32),
        }
        return streams, params

    key = jax.random.PRNGKey(0)
    # case 0: N=64  -> padded to 128 (exercises the key-padding mask)
    # case 1: N=144 -> padded to 256 (exercises 2 query tiles x 2 key tiles /
    #                                 cross-tile online softmax)
    cases = [(2, 16, 8, 8), (2, 16, 12, 12)]
    for idx, (B, C, T, J) in enumerate(cases):
        streams, params = make_case(jax.random.fold_in(key, idx), B, C, T, J)
        out = jax.block_until_ready(advanced_cross_stream_attention(streams, params))
        ref = jax.block_until_ready(reference_jax(streams, params))
        assert out.shape == (B, C, T, J)
        err = float(jnp.max(jnp.abs(out - ref)))
        # Tolerance relaxed for the deliberate bf16 MXU operands (x / weights /
        # attention probs); softmax itself is f32.  A structural bug would give
        # O(1) errors, well above this threshold.
        assert jnp.allclose(out, ref, rtol=5e-2, atol=5e-2), (
            f"case {idx}: max abs err {err}"
        )
    print("KERNEL_OK")
</pallas_src>

<mosaic_0001>
module attributes {stable_mosaic.version = 11 : i64} {
  func.func @_cross_attn_kernel(%arg0: i32, %arg1: i32, %arg2: i32, %arg3: i32, %arg4: memref<3xf32, #tpu.memory_space<smem>>, %arg5: memref<1x1x16x128xbf16, #tpu.memory_space<vmem>>, %arg6: memref<1x1x16x128xbf16, #tpu.memory_space<vmem>>, %arg7: memref<16x16xbf16, #tpu.memory_space<vmem>>, %arg8: memref<32x16xbf16, #tpu.memory_space<vmem>>, %arg9: memref<16x1xf32, #tpu.memory_space<vmem>>, %arg10: memref<32x1xf32, #tpu.memory_space<vmem>>, %arg11: memref<1x16x128xf32, #tpu.memory_space<vmem>>, %arg12: memref<16x128xbf16, #tpu.memory_space<vmem>>, %arg13: memref<1x128xf32, #tpu.memory_space<vmem>>, %arg14: memref<1x128xf32, #tpu.memory_space<vmem>>, %arg15: memref<16x128xf32, #tpu.memory_space<vmem>>) attributes {dimension_semantics = [#tpu.dimension_semantics<parallel>, #tpu.dimension_semantics<parallel>, #tpu.dimension_semantics<arbitrary>, #tpu.dimension_semantics<arbitrary>], iteration_bounds = array<i64: 2, 1, 3, 1>, scalar_prefetch = 1 : i64, scratch_operands = 4 : i64, tpu.core_type = #tpu.core_type<tc>, window_params = [{transform_indices = @transform_0, window_bounds = array<i64: 1, 1, 16, 128>}, {transform_indices = @transform_1, window_bounds = array<i64: 1, 1, 16, 128>}, {pipeline_mode = #tpu.pipeline_mode<synchronous>, transform_indices = @transform_2, window_bounds = array<i64: 16, 16>}, {pipeline_mode = #tpu.pipeline_mode<synchronous>, transform_indices = @transform_3, window_bounds = array<i64: 32, 16>}, {pipeline_mode = #tpu.pipeline_mode<synchronous>, transform_indices = @transform_4, window_bounds = array<i64: 16, 1>}, {pipeline_mode = #tpu.pipeline_mode<synchronous>, transform_indices = @transform_5, window_bounds = array<i64: 32, 1>}, {transform_indices = @transform_6, window_bounds = array<i64: 1, 16, 128>}]} {
    %c0_i32 = arith.constant 0 : i32
    %0 = arith.cmpi eq, %arg2, %c0_i32 : i32
    %c0_i32_0 = arith.constant 0 : i32
    %1 = arith.cmpi eq, %arg3, %c0_i32_0 : i32
    %2 = arith.andi %0, %1 : i1
    %3 = arith.extui %2 : i1 to i32
    %c0_i32_1 = arith.constant 0 : i32
    %4 = arith.cmpi ne, %3, %c0_i32_1 : i32
    scf.if %4 {
      %cst_32 = arith.constant 0.000000e+00 : f32
      %55 = vector.broadcast %cst_32 : f32 to vector<1x16x128xf32>
      %c0_33 = arith.constant 0 : index
      %c0_34 = arith.constant 0 : index
      %c0_35 = arith.constant 0 : index
      %56 = vector.load %arg11[%c0_33, %c0_34, %c0_35] : memref<1x16x128xf32, #tpu.memory_space<vmem>>, vector<1x16x128xf32>
      tpu.vector_store %arg11[%c0_33, %c0_34, %c0_35], %55 {strides = array<i32>} : memref<1x16x128xf32, #tpu.memory_space<vmem>>, vector<1x16x128xf32>,
    } else {
    }
    %c0_i32_2 = arith.constant 0 : i32
    %5 = arith.cmpi eq, %arg3, %c0_i32_2 : i32
    %6 = arith.extui %5 : i1 to i32
    %c0_i32_3 = arith.constant 0 : i32
    %7 = arith.cmpi ne, %6, %c0_i32_3 : i32
    scf.if %7 {
      %cst_32 = arith.constant -1.000000e+30 : f32
      %55 = vector.broadcast %cst_32 : f32 to vector<1x128xf32>
      %c0_33 = arith.constant 0 : index
      %c0_34 = arith.constant 0 : index
      %56 = vector.load %arg13[%c0_33, %c0_34] : memref<1x128xf32, #tpu.memory_space<vmem>>, vector<1x128xf32>
      tpu.vector_store %arg13[%c0_33, %c0_34], %55 {strides = array<i32>} : memref<1x128xf32, #tpu.memory_space<vmem>>, vector<1x128xf32>,
      %cst_35 = arith.constant 0.000000e+00 : f32
      %57 = vector.broadcast %cst_35 : f32 to vector<1x128xf32>
      %c0_36 = arith.constant 0 : index
      %c0_37 = arith.constant 0 : index
      %58 = vector.load %arg14[%c0_36, %c0_37] : memref<1x128xf32, #tpu.memory_space<vmem>>, vector<1x128xf32>
      tpu.vector_store %arg14[%c0_36, %c0_37], %57 {strides = array<i32>} : memref<1x128xf32, #tpu.memory_space<vmem>>, vector<1x128xf32>,
      %cst_38 = arith.constant 0.000000e+00 : f32
      %59 = vector.broadcast %cst_38 : f32 to vector<16x128xf32>
      %c0_39 = arith.constant 0 : index
      %c0_40 = arith.constant 0 : index
      %60 = vector.load %arg15[%c0_39, %c0_40] : memref<16x128xf32, #tpu.memory_space<vmem>>, vector<16x128xf32>
      tpu.vector_store %arg15[%c0_39, %c0_40], %59 {strides = array<i32>} : memref<16x128xf32, #tpu.memory_space<vmem>>, vector<16x128xf32>,
      %c0_41 = arith.constant 0 : index
      %c0_42 = arith.constant 0 : index
      %61 = vector.load %arg7[%c0_41, %c0_42] : memref<16x16xbf16, #tpu.memory_space<vmem>>, vector<16x16xbf16>
      %c0_43 = arith.constant 0 : index
      %c0_44 = arith.constant 0 : index
      %c0_45 = arith.constant 0 : index
      %c0_46 = arith.constant 0 : index
      %62 = vector.load %arg5[%c0_43, %c0_44, %c0_45, %c0_46] : memref<1x1x16x128xbf16, #tpu.memory_space<vmem>>, vector<1x1x16x128xbf16>
      %63 = vector.shape_cast %62 : vector<1x1x16x128xbf16> to vector<16x128xbf16>
      %cst_47 = arith.constant dense<0.000000e+00> : vector<16x128xf32>
      %64 = tpu.matmul %61, %63, %cst_47 {dimension_numbers = #tpu.dot_dimension_numbers<[1], [0], [0], [1], [0, 0, 1, 1], [], []>} : vector<16x16xbf16>, vector<16x128xbf16>, vector<16x128xf32> -> vector<16x128xf32>
      %c0_48 = arith.constant 0 : index
      %c0_49 = arith.constant 0 : index
      %65 = vector.load %arg9[%c0_48, %c0_49] : memref<16x1xf32, #tpu.memory_space<vmem>>, vector<16x1xf32>
      %66 = vector.broadcast %65 : vector<16x1xf32> to vector<16x128xf32>
      %67 = arith.addf %64, %66 : vector<16x128xf32>
      %68 = arith.truncf %67 : vector<16x128xf32> to vector<16x128xbf16>
      %c0_50 = arith.constant 0 : index
      %c0_51 = arith.constant 0 : index
      %69 = vector.load %arg12[%c0_50, %c0_51] : memref<16x128xbf16, #tpu.memory_space<vmem>>, vector<16x128xbf16>
      tpu.vector_store %arg12[%c0_50, %c0_51], %68 {strides = array<i32>} : memref<16x128xbf16, #tpu.memory_space<vmem>>, vector<16x128xbf16>,
    } else {
    }
    %c0 = arith.constant 0 : index
    %c0_4 = arith.constant 0 : index
    %8 = vector.load %arg8[%c0, %c0_4] : memref<32x16xbf16, #tpu.memory_space<vmem>>, vector<32x16xbf16>
    %c0_5 = arith.constant 0 : index
    %c0_6 = arith.constant 0 : index
    %c0_7 = arith.constant 0 : index
    %c0_8 = arith.constant 0 : index
    %9 = vector.load %arg6[%c0_5, %c0_6, %c0_7, %c0_8] : memref<1x1x16x128xbf16, #tpu.memory_space<vmem>>, vector<1x1x16x128xbf16>
    %10 = vector.shape_cast %9 : vector<1x1x16x128xbf16> to vector<16x128xbf16>
    %cst = arith.constant dense<0.000000e+00> : vector<32x128xf32>
    %11 = tpu.matmul %8, %10, %cst {dimension_numbers = #tpu.dot_dimension_numbers<[1], [0], [0], [1], [0, 0, 1, 1], [], []>} : vector<32x16xbf16>, vector<16x128xbf16>, vector<32x128xf32> -> vector<32x128xf32>
    %c0_9 = arith.constant 0 : index
    %c0_10 = arith.constant 0 : index
    %12 = vector.load %arg10[%c0_9, %c0_10] : memref<32x1xf32, #tpu.memory_space<vmem>>, vector<32x1xf32>
    %13 = vector.broadcast %12 : vector<32x1xf32> to vector<32x128xf32>
    %14 = arith.addf %11, %13 : vector<32x128xf32>
    %15 = vector.extract_strided_slice %14 {offsets = [0, 0], sizes = [16, 128], strides = [1, 1]} : vector<32x128xf32> to vector<16x128xf32>
    %16 = arith.truncf %15 : vector<16x128xf32> to vector<16x128xbf16>
    %17 = vector.extract_strided_slice %14 {offsets = [16, 0], sizes = [16, 128], strides = [1, 1]} : vector<32x128xf32> to vector<16x128xf32>
    %18 = arith.truncf %17 : vector<16x128xf32> to vector<16x128xbf16>
    %c0_11 = arith.constant 0 : index
    %c0_12 = arith.constant 0 : index
    %19 = vector.load %arg12[%c0_11, %c0_12] : memref<16x128xbf16, #tpu.memory_space<vmem>>, vector<16x128xbf16>
    %cst_13 = arith.constant dense<0.000000e+00> : vector<128x128xf32>
    %20 = tpu.matmul %16, %19, %cst_13 {dimension_numbers = #tpu.dot_dimension_numbers<[0], [0], [1], [1], [0, 1, 1, 1], [], []>} : vector<16x128xbf16>, vector<16x128xbf16>, vector<128x128xf32> -> vector<128x128xf32>
    %c128_i32 = arith.constant 128 : i32
    %21 = arith.muli %arg3, %c128_i32 : i32
    %22 = tpu.iota {dimensions = array<i32: 0>} : vector<128x128xi32>
    %23 = vector.broadcast %21 : i32 to vector<128x128xi32>
    %24 = arith.addi %23, %22 : vector<128x128xi32>
    %c64_i32 = arith.constant 64 : i32
    %25 = vector.broadcast %c64_i32 : i32 to vector<128x128xi32>
    %26 = arith.cmpi slt, %24, %25 : vector<128x128xi32>
    %cst_14 = arith.constant -1.000000e+30 : f32
    %27 = vector.broadcast %cst_14 : f32 to vector<128x128xf32>
    %28 = arith.select %26, %20, %27 : vector<128x128xi1>, vector<128x128xf32>
    %c0_15 = arith.constant 0 : index
    %c0_16 = arith.constant 0 : index
    %29 = vector.load %arg13[%c0_15, %c0_16] : memref<1x128xf32, #tpu.memory_space<vmem>>, vector<1x128xf32>
    %cst_17 = arith.constant dense<0xFF800000> : vector<128xf32>
    %30 = vector.multi_reduction <maximumf>, %28, %cst_17 [0] : vector<128x128xf32> to vector<128xf32>
    %31 = vector.shape_cast %30 : vector<128xf32> to vector<1x128xf32>
    %32 = arith.maximumf %29, %31 : vector<1x128xf32>
    %33 = arith.subf %29, %32 : vector<1x128xf32>
    %34 = math.exp %33 : vector<1x128xf32>
    %35 = vector.broadcast %32 : vector<1x128xf32> to vector<128x128xf32>
    %36 = arith.subf %28, %35 : vector<128x128xf32>
    %37 = math.exp %36 : vector<128x128xf32>
    %c0_18 = arith.constant 0 : index
    %c0_19 = arith.constant 0 : index
    %38 = vector.load %arg14[%c0_18, %c0_19] : memref<1x128xf32, #tpu.memory_space<vmem>>, vector<1x128xf32>
    %39 = arith.mulf %34, %38 : vector<1x128xf32>
    %cst_20 = arith.constant dense<0.000000e+00> : vector<128xf32>
    %40 = vector.multi_reduction <add>, %37, %cst_20 [0] : vector<128x128xf32> to vector<128xf32>
    %41 = vector.shape_cast %40 : vector<128xf32> to vector<1x128xf32>
    %42 = arith.addf %39, %41 : vector<1x128xf32>
    %c0_21 = arith.constant 0 : index
    %c0_22 = arith.constant 0 : index
    %43 = vector.load %arg14[%c0_21, %c0_22] : memref<1x128xf32, #tpu.memory_space<vmem>>, vector<1x128xf32>
    tpu.vector_store %arg14[%c0_21, %c0_22], %42 {strides = array<i32>} : memref<1x128xf32, #tpu.memory_space<vmem>>, vector<1x128xf32>,
    %c0_23 = arith.constant 0 : index
    %c0_24 = arith.constant 0 : index
    %44 = vector.load %arg13[%c0_23, %c0_24] : memref<1x128xf32, #tpu.memory_space<vmem>>, vector<1x128xf32>
    tpu.vector_store %arg13[%c0_23, %c0_24], %32 {strides = array<i32>} : memref<1x128xf32, #tpu.memory_space<vmem>>, vector<1x128xf32>,
    %45 = arith.truncf %37 : vector<128x128xf32> to vector<128x128xbf16>
    %cst_25 = arith.constant dense<0.000000e+00> : vector<16x128xf32>
    %46 = tpu.matmul %18, %45, %cst_25 {dimension_numbers = #tpu.dot_dimension_numbers<[1], [0], [0], [1], [0, 0, 1, 1], [], []>} : vector<16x128xbf16>, vector<128x128xbf16>, vector<16x128xf32> -> vector<16x128xf32>
    %c0_26 = arith.constant 0 : index
    %c0_27 = arith.constant 0 : index
    %47 = vector.load %arg15[%c0_26, %c0_27] : memref<16x128xf32, #tpu.memory_space<vmem>>, vector<16x128xf32>
    %48 = vector.broadcast %34 : vector<1x128xf32> to vector<16x128xf32>
    %49 = arith.mulf %47, %48 : vector<16x128xf32>
    %50 = arith.addf %49, %46 : vector<16x128xf32>
    %c0_28 = arith.constant 0 : index
    %c0_29 = arith.constant 0 : index
    %51 = vector.load %arg15[%c0_28, %c0_29] : memref<16x128xf32, #tpu.memory_space<vmem>>, vector<16x128xf32>
    tpu.vector_store %arg15[%c0_28, %c0_29], %50 {strides = array<i32>} : memref<16x128xf32, #tpu.memory_space<vmem>>, vector<16x128xf32>,
    %c0_i32_30 = arith.constant 0 : i32
    %52 = arith.cmpi eq, %arg3, %c0_i32_30 : i32
    %53 = arith.extui %52 : i1 to i32
    %c0_i32_31 = arith.constant 0 : i32
    %54 = arith.cmpi ne, %53, %c0_i32_31 : i32
    scf.if %54 {
      %c0_32 = arith.constant 0 : index
      %c0_33 = arith.constant 0 : index
      %c0_34 = arith.constant 0 : index
      %55 = vector.load %arg11[%c0_32, %c0_33, %c0_34] : memref<1x16x128xf32, #tpu.memory_space<vmem>>, vector<1x16x128xf32>
      %56 = vector.shape_cast %55 : vector<1x16x128xf32> to vector<16x128xf32>
      %c0_35 = arith.constant 0 : index
      %c0_36 = arith.constant 0 : index
      %57 = vector.load %arg15[%c0_35, %c0_36] : memref<16x128xf32, #tpu.memory_space<vmem>>, vector<16x128xf32>
      %58 = arith.index_cast %arg2 : i32 to index
      %59 = memref.load %arg4[%58] : memref<3xf32, #tpu.memory_space<smem>>
      %c0_37 = arith.constant 0 : index
      %c0_38 = arith.constant 0 : index
      %60 = vector.load %arg14[%c0_37, %c0_38] : memref<1x128xf32, #tpu.memory_space<vmem>>, vector<1x128xf32>
      %61 = vector.broadcast %59 : f32 to vector<1x128xf32>
      %62 = arith.divf %61, %60 : vector<1x128xf32>
      %63 = vector.broadcast %62 : vector<1x128xf32> to vector<16x128xf32>
      %64 = arith.mulf %57, %63 : vector<16x128xf32>
      %65 = arith.addf %56, %64 : vector<16x128xf32>
      %c0_39 = arith.constant 0 : index
      %c0_40 = arith.constant 0 : index
      %c0_41 = arith.constant 0 : index
      %66 = vector.load %arg11[%c0_39, %c0_40, %c0_41] : memref<1x16x128xf32, #tpu.memory_space<vmem>>, vector<1x16x128xf32>
      %67 = vector.shape_cast %66 : vector<1x16x128xf32> to vector<16x128xf32>
      %68 = vector.shape_cast %65 : vector<16x128xf32> to vector<1x16x128xf32>
      tpu.vector_store %arg11[%c0_39, %c0_40, %c0_41], %68 {strides = array<i32>} : memref<1x16x128xf32, #tpu.memory_space<vmem>>, vector<1x16x128xf32>,
    } else {
    }
    return
  }
  func.func @transform_0(%arg0: i32, %arg1: i32, %arg2: i32, %arg3: i32, %arg4: memref<3xf32, #tpu.memory_space<smem>>) -> (i32, i32, i32, i32) {
    %c0_i32 = arith.constant 0 : i32
    %c0_i32_0 = arith.constant 0 : i32
    return %arg2, %arg0, %c0_i32, %arg1 : i32, i32, i32, i32
  }
  func.func @transform_1(%arg0: i32, %arg1: i32, %arg2: i32, %arg3: i32, %arg4: memref<3xf32, #tpu.memory_space<smem>>) -> (i32, i32, i32, i32) {
    %c1_i32 = arith.constant 1 : i32
    %0 = arith.addi %arg2, %c1_i32 : i32
    %c3_i32 = arith.constant 3 : i32
    %c0_i32 = arith.constant 0 : i32
    %1 = arith.cmpi eq, %c3_i32, %c0_i32 : i32
    %c1_i32_0 = arith.constant 1 : i32
    %2 = arith.select %1, %c1_i32_0, %c3_i32 : i32
    %3 = arith.remsi %0, %2 : i32
    %c0_i32_1 = arith.constant 0 : i32
    %4 = arith.cmpi ne, %3, %c0_i32_1 : i32
    %c0_i32_2 = arith.constant 0 : i32
    %5 = arith.cmpi slt, %3, %c0_i32_2 : i32
    %c0_i32_3 = arith.constant 0 : i32
    %6 = arith.cmpi slt, %2, %c0_i32_3 : i32
    %7 = arith.xori %5, %6 : i1
    %8 = arith.andi %7, %4 : i1
    %9 = arith.addi %3, %2 : i32
    %10 = arith.select %8, %9, %3 : i32
    %c0_i32_4 = arith.constant 0 : i32
    %c0_i32_5 = arith.constant 0 : i32
    return %10, %arg0, %c0_i32_4, %arg3 : i32, i32, i32, i32
  }
  func.func @transform_2(%arg0: i32, %arg1: i32, %arg2: i32, %arg3: i32, %arg4: memref<3xf32, #tpu.memory_space<smem>>) -> (i32, i32) {
    %c0_i32 = arith.constant 0 : i32
    %c0_i32_0 = arith.constant 0 : i32
    %c0_i32_1 = arith.constant 0 : i32
    return %c0_i32, %c0_i32_0 : i32, i32
  }
  func.func @transform_3(%arg0: i32, %arg1: i32, %arg2: i32, %arg3: i32, %arg4: memref<3xf32, #tpu.memory_space<smem>>) -> (i32, i32) {
    %c0_i32 = arith.constant 0 : i32
    %c0_i32_0 = arith.constant 0 : i32
    %c0_i32_1 = arith.constant 0 : i32
    return %c0_i32, %c0_i32_0 : i32, i32
  }
  func.func @transform_4(%arg0: i32, %arg1: i32, %arg2: i32, %arg3: i32, %arg4: memref<3xf32, #tpu.memory_space<smem>>) -> (i32, i32) {
    %c0_i32 = arith.constant 0 : i32
    %c0_i32_0 = arith.constant 0 : i32
    %c0_i32_1 = arith.constant 0 : i32
    return %c0_i32, %c0_i32_0 : i32, i32
  }
  func.func @transform_5(%arg0: i32, %arg1: i32, %arg2: i32, %arg3: i32, %arg4: memref<3xf32, #tpu.memory_space<smem>>) -> (i32, i32) {
    %c0_i32 = arith.constant 0 : i32
    %c0_i32_0 = arith.constant 0 : i32
    %c0_i32_1 = arith.constant 0 : i32
    return %c0_i32, %c0_i32_0 : i32, i32
  }
  func.func @transform_6(%arg0: i32, %arg1: i32, %arg2: i32, %arg3: i32, %arg4: memref<3xf32, #tpu.memory_space<smem>>) -> (i32, i32, i32) {
    %c0_i32 = arith.constant 0 : i32
    %c0_i32_0 = arith.constant 0 : i32
    return %arg0, %c0_i32, %arg1 : i32, i32, i32
  }
}

</mosaic_0001>

<llo_original>
// kernel: tpu_custom_call.1
$region0: #{tpu_custom_call.1}
  #allocation0 [shape = 'u32[]', space=smem, size = 0x4, offset = 0x4, fixed_abs, tag = 'smem constant byte address 0x4 - core index']
  #allocation1 [shape = 'u32[144,128]{1,0:T(1,128)}', space=vmem, size = 0x12000, scoped, tag = 'internal scratch']
  #allocation2 [shape = 'bf16[16,128]{1,0:T(8,128)(2,1)}', space=vmem, size = 0x1000, scoped, tag = 'scratch operand']
  #allocation3 [shape = 'f32[1,128]{1,0:T(1,128)}', space=vmem, size = 0x200, scoped, tag = 'scratch operand']
  #allocation4 [shape = 'f32[1,128]{1,0:T(1,128)}', space=vmem, size = 0x200, scoped, tag = 'scratch operand']
  #allocation5 [shape = 'f32[16,128]{1,0:T(8,128)}', space=vmem, size = 0x2000, scoped, tag = 'scratch operand']
  #allocation6 [shape = 's32[1]{0}', space=sflag, size = 0x4, scoped, tag = 'scoped memory for tpu_custom_call.1']
  #allocation7 [shape = 'u8[512]{0}', space=smem, size = 0x200, scoped, tag = 'prefetched SMEM operand 0']
  %s0 = inlined_call_operand.vmem [shape: f32[3], index: 0, kind: input, shape index: {}]
  %s1 = inlined_call_operand.vmem [shape: bf16[3,2,16,128], index: 1, kind: input, shape index: {}]
  %s2 = inlined_call_operand.hbm [shape: bf16[3,2,16,128], index: 2, kind: input, shape index: {}]
  %s3 = inlined_call_operand.vmem [shape: bf16[16,16], index: 3, kind: input, shape index: {}]
  %s4 = inlined_call_operand.vmem [shape: bf16[32,16], index: 4, kind: input, shape index: {}]
  %s5 = inlined_call_operand.vmem [shape: f32[16,1], index: 5, kind: input, shape index: {}]
  %s6 = inlined_call_operand.vmem [shape: f32[32,1], index: 6, kind: input, shape index: {}]
  %s7 = inlined_call_operand.hbm [shape: f32[2,16,128], index: 7, kind: output, shape index: {}]
  %s8 = sld [smem:[#allocation0]]
  $region73: #{tpu_custom_call.1} parent=0
    _
  %s10 = ssub.s32 1, %s8
  %s11 = scalar_select 0, %s10, %s8
  %s12 = sshll.u32 %s0, 4
  %s13 = int_to_ptr.vmem [resolvable:$true] %s12
  %15 = dma.vmem_to_smem %s13, 16, [#allocation7], [#allocation6]
  %16 = dma.done [#allocation6], 16
  %17 = sfence
  $region1: #{tpu_custom_call.1} parent=0
    #allocation8 [shape = 'u8[8192]{0}', space=vmem, size = 0x2000, scoped, tag = 'input window, operand 2']
    #allocation9 [shape = 's32[2]{0}', space=sflag, size = 0x8, scoped, tag = 'scoped memory for tpu_custom_call.1']
    #allocation10 [shape = 's32[2]{0}', space=sflag, size = 0x8, scoped, tag = 'scoped memory for tpu_custom_call.1']
    #allocation11 [shape = 'u8[16384]{0}', space=vmem, size = 0x4000, scoped, tag = 'output window, operand 0']
    %18 = vsyncpa [#allocation9], 0
    %s19 = scalar_lea.sflag [#allocation9], 1
    %20 = vsyncpa %s19, 0
    %21 = vsyncpa [#allocation10], 0
    %s22 = scalar_lea.sflag [#allocation10], 1
    %23 = vsyncpa %s22, 0
    loop: start=0, step=1, limit=8
    $region2: #{tpu_custom_call.1} parent=1 // loop_pre_header
      _
    $region3: #{tpu_custom_call.1} parent=1 // loop_header
      %s25 = sphi 0, %s29
      %p26 = scmp.ge.s32.totalorder %s25, 8
      %s32 = sphi 0, %s58
      %s33 = sphi 0, %s54
      %s34 = sphi 0, %s50
      %s35 = sphi 0, %s46
      %s36 = sphi 0, %s32
      %s37 = sphi 0, %s33
      %s38 = sphi 0, %s34
      %s39 = sphi 0, %s35
      %s40 = sphi 0, %s36
      %s41 = sphi 0, %s37
      %s42 = sphi 0, %s38
      %s43 = sphi 0, %s39
      %s65 = sphi 0, %s67
      %s68 = sphi 0, %s65
      %s69 = sphi 0, %s68
      %s85 = sphi 0, %s69
      %s123 = sphi 0, %s125
      %s126 = sphi 0, %s123
      %s127 = sphi 0, %s126
      %s143 = sphi 0, %s127
      %s147 = sphi 0, %s147
      %s149 = sphi 0, %s147
      %s150 = sphi 0, %s149
      %s164 = sphi 0, %s150
      %s168 = sphi 0, %s168
      %s170 = sphi 0, %s168
      %s171 = sphi 0, %s170
      %s185 = sphi 0, %s171
      %s189 = sphi 0, %s189
      %s191 = sphi 0, %s189
      %s192 = sphi 0, %s191
      %s206 = sphi 0, %s192
      %s210 = sphi 0, %s210
      %s212 = sphi 0, %s210
      %s213 = sphi 0, %s212
      %s227 = sphi 0, %s213
      %s235 = sphi 0, %s237
      %s238 = sphi 0, %s235
      %s239 = sphi 0, %s238
      %s255 = sphi 0, %s239
    $region4: #{tpu_custom_call.1} parent=1 // loop_header_branch
      %28 = sbr.rel (%p26) target = $region8
    $region5: #{tpu_custom_call.1} parent=1 // loop_body
      %s30 = ssub.s32 %s25, 1
      %s31 = ssub.s32 %s25, 2
      %s44 = sadd.s32 1, %s35
      %p45 = scmp.ge.s32.totalorder %s44, 1
      %s46 = scalar_select %p45, 0, %s44
      %s47 = sadd.s32 1, %s34
      %s48 = scalar_select %p45, %s47, %s34
      %p49 = scmp.ge.s32.totalorder %s48, 3
      %s50 = scalar_select %p49, 0, %s48
      %s51 = sadd.s32 1, %s33
      %s52 = scalar_select %p49, %s51, %s33
      %p53 = scmp.ge.s32.totalorder %s52, 1
      %s54 = scalar_select %p53, 0, %s52
      %s55 = sadd.s32 1, %s32
      %s56 = scalar_select %p53, %s55, %s32
      %p57 = scmp.ge.s32.totalorder %s56, 2
      %s58 = scalar_select %p57, 0, %s56
      %s59 = ssub.s32 %s34, %s50
      %s60 = ssub.s32 %s32, %s58
      %s61 = sor.u32 %s59, %s60
      %s62 = ssub.s32 %s33, %s54
      %s63 = sor.u32 %s61, %s62
      %p64 = scmp.eq.s32.totalorder %s63, 0
      %s66 = sadd.s32 %s65, 1
      %s67 = scalar_select %p64, %s65, %s66
      %p70 = pneg %p64
      %p71 = scmp.eq.s32.totalorder %s25, 5
      %p72 = por %p70, %p71
      %p73 = scmp.ne.s32.totalorder %s65, %s68
      %p74 = scmp.eq.s32.totalorder %s25, 0
      %p75 = por %p73, %p74
      %p76 = scmp.ne.s32.totalorder %s65, %s68
      %p77 = scmp.eq.s32.totalorder %s30, 5
      %p78 = por %p76, %p77
      %p79 = scmp.ne.s32.totalorder %s68, %s69
      %p80 = scmp.eq.s32.totalorder %s30, 0
      %p81 = por %p79, %p80
      %p82 = scmp.ne.s32.totalorder %s68, %s69
      %p83 = scmp.eq.s32.totalorder %s31, 5
      %p84 = por %p82, %p83
      %p86 = scmp.ne.s32.totalorder %s69, %s85
      %p87 = scmp.eq.s32.totalorder %s31, 0
      %p88 = por %p86, %p87
      %s89 = sadd.s32 %s34, 1
      %p90 = scmp.lt.s32.totalorder %s89, 0
      %s91 = ssub.s32 0, %s89
      %s92 = scalar_select %p90, %s91, %s89
      %s93 = sdiv.u32.pop %s92, 3
      %s94 = srem.u32.pop %s92, 3
      %s95 = ssub.s32 0, %s94
      %s96 = scalar_select %p90, %s95, %s94
      %p97 = scmp.ne.s32.totalorder %s96, 0
      %p98 = scmp.lt.s32.totalorder %s96, 0
      %p99 = pnand %p98, %p97
      %p100 = pneg %p99
      %s101 = sadd.s32 %s96, 3
      %s102 = scalar_select %p100, %s101, %s96
      %s103 = sadd.s32 %s50, 1
      %p104 = scmp.lt.s32.totalorder %s103, 0
      %s105 = ssub.s32 0, %s103
      %s106 = scalar_select %p104, %s105, %s103
      %s107 = sdiv.u32.pop %s106, 3
      %s108 = srem.u32.pop %s106, 3
      %s109 = ssub.s32 0, %s108
      %s110 = scalar_select %p104, %s109, %s108
      %p111 = scmp.ne.s32.totalorder %s110, 0
      %p112 = scmp.lt.s32.totalorder %s110, 0
      %p113 = pnand %p112, %p111
      %p114 = pneg %p113
      %s115 = sadd.s32 %s110, 3
      %s116 = scalar_select %p114, %s115, %s110
      %s117 = ssub.s32 %s102, %s116
      %s118 = ssub.s32 %s32, %s58
      %s119 = sor.u32 %s117, %s118
      %s120 = ssub.s32 %s35, %s46
      %s121 = sor.u32 %s119, %s120
      %p122 = scmp.eq.s32.totalorder %s121, 0
      %s124 = sadd.s32 %s123, 1
      %s125 = scalar_select %p122, %s123, %s124
      %p128 = pneg %p122
      %p129 = scmp.eq.s32.totalorder %s25, 5
      %p130 = por %p128, %p129
      %p131 = scmp.ne.s32.totalorder %s123, %s126
      %p132 = scmp.eq.s32.totalorder %s25, 0
      %p133 = por %p131, %p132
      %p134 = scmp.ne.s32.totalorder %s123, %s126
      %p135 = scmp.eq.s32.totalorder %s30, 5
      %p136 = por %p134, %p135
      %p137 = scmp.ne.s32.totalorder %s126, %s127
      %p138 = scmp.eq.s32.totalorder %s30, 0
      %p139 = por %p137, %p138
      %p140 = scmp.ne.s32.totalorder %s126, %s127
      %p141 = scmp.eq.s32.totalorder %s31, 5
      %p142 = por %p140, %p141
      %p144 = scmp.ne.s32.totalorder %s127, %s143
      %p145 = scmp.eq.s32.totalorder %s31, 0
      %p146 = por %p144, %p145
      %s148 = sadd.s32 %s147, 1
      %p151 = scmp.eq.s32.totalorder %s25, 5
      %p152 = scmp.ne.s32.totalorder %s147, %s149
      %p153 = scmp.eq.s32.totalorder %s25, 0
      %p154 = por %p152, %p153
      %p155 = scmp.ne.s32.totalorder %s147, %s149
      %p156 = scmp.eq.s32.totalorder %s30, 5
      %p157 = por %p155, %p156
      %p158 = scmp.ne.s32.totalorder %s149, %s150
      %p159 = scmp.eq.s32.totalorder %s30, 0
      %p160 = por %p158, %p159
      %p161 = scmp.ne.s32.totalorder %s149, %s150
      %p162 = scmp.eq.s32.totalorder %s31, 5
      %p163 = por %p161, %p162
      %p165 = scmp.ne.s32.totalorder %s150, %s164
      %p166 = scmp.eq.s32.totalorder %s31, 0
      %p167 = por %p165, %p166
      %s169 = sadd.s32 %s168, 1
      %p172 = scmp.eq.s32.totalorder %s25, 5
      %p173 = scmp.ne.s32.totalorder %s168, %s170
      %p174 = scmp.eq.s32.totalorder %s25, 0
      %p175 = por %p173, %p174
      %p176 = scmp.ne.s32.totalorder %s168, %s170
      %p177 = scmp.eq.s32.totalorder %s30, 5
      %p178 = por %p176, %p177
      %p179 = scmp.ne.s32.totalorder %s170, %s171
      %p180 = scmp.eq.s32.totalorder %s30, 0
      %p181 = por %p179, %p180
      %p182 = scmp.ne.s32.totalorder %s170, %s171
      %p183 = scmp.eq.s32.totalorder %s31, 5
      %p184 = por %p182, %p183
      %p186 = scmp.ne.s32.totalorder %s171, %s185
      %p187 = scmp.eq.s32.totalorder %s31, 0
      %p188 = por %p186, %p187
      %s190 = sadd.s32 %s189, 1
      %p193 = scmp.eq.s32.totalorder %s25, 5
      %p194 = scmp.ne.s32.totalorder %s189, %s191
      %p195 = scmp.eq.s32.totalorder %s25, 0
      %p196 = por %p194, %p195
      %p197 = scmp.ne.s32.totalorder %s189, %s191
      %p198 = scmp.eq.s32.totalorder %s30, 5
      %p199 = por %p197, %p198
      %p200 = scmp.ne.s32.totalorder %s191, %s192
      %p201 = scmp.eq.s32.totalorder %s30, 0
      %p202 = por %p200, %p201
      %p203 = scmp.ne.s32.totalorder %s191, %s192
      %p204 = scmp.eq.s32.totalorder %s31, 5
      %p205 = por %p203, %p204
      %p207 = scmp.ne.s32.totalorder %s192, %s206
      %p208 = scmp.eq.s32.totalorder %s31, 0
      %p209 = por %p207, %p208
      %s211 = sadd.s32 %s210, 1
      %p214 = scmp.eq.s32.totalorder %s25, 5
      %p215 = scmp.ne.s32.totalorder %s210, %s212
      %p216 = scmp.eq.s32.totalorder %s25, 0
      %p217 = por %p215, %p216
      %p218 = scmp.ne.s32.totalorder %s210, %s212
      %p219 = scmp.eq.s32.totalorder %s30, 5
      %p220 = por %p218, %p219
      %p221 = scmp.ne.s32.totalorder %s212, %s213
      %p222 = scmp.eq.s32.totalorder %s30, 0
      %p223 = por %p221, %p222
      %p224 = scmp.ne.s32.totalorder %s212, %s213
      %p225 = scmp.eq.s32.totalorder %s31, 5
      %p226 = por %p224, %p225
      %p228 = scmp.ne.s32.totalorder %s213, %s227
      %p229 = scmp.eq.s32.totalorder %s31, 0
      %p230 = por %p228, %p229
      %s231 = ssub.s32 %s32, %s58
      %s232 = ssub.s32 %s33, %s54
      %s233 = sor.u32 %s231, %s232
      %p234 = scmp.eq.s32.totalorder %s233, 0
      %s236 = sadd.s32 %s235, 1
      %s237 = scalar_select %p234, %s235, %s236
      %p240 = pneg %p234
      %p241 = scmp.eq.s32.totalorder %s25, 5
      %p242 = por %p240, %p241
      %p243 = scmp.ne.s32.totalorder %s235, %s238
      %p244 = scmp.eq.s32.totalorder %s25, 0
      %p245 = por %p243, %p244
      %p246 = scmp.ne.s32.totalorder %s235, %s238
      %p247 = scmp.eq.s32.totalorder %s30, 5
      %p248 = por %p246, %p247
      %p249 = scmp.ne.s32.totalorder %s238, %s239
      %p250 = scmp.eq.s32.totalorder %s30, 0
      %p251 = por %p249, %p250
      %p252 = scmp.ne.s32.totalorder %s238, %s239
      %p253 = scmp.eq.s32.totalorder %s31, 5
      %p254 = por %p252, %p253
      %p256 = scmp.ne.s32.totalorder %s239, %s255
      %p257 = scmp.eq.s32.totalorder %s31, 0
      %p258 = por %p256, %p257
      %p259 = scmp.le.s32.totalorder 1, %s25
      %p260 = scmp.lt.s32.totalorder %s25, 7
      %p261 = pnand %p259, %p260
      %p262 = pneg %p261
      // Predicated region
      $region9: #{tpu_custom_call.1} parent=5 // pred_check
        _
      $region10: #{tpu_custom_call.1} parent=5 // pred_check_branch
        %264 = sbr.rel (%p261) target = $region12
      $region11: #{tpu_custom_call.1} parent=5 // pred_region
        %s265 = ssub.s32 %s25, 1
        // Predicated region
        $region13: #{tpu_custom_call.1} parent=11 // pred_check
          %p266 = pneg %p160
        $region14: #{tpu_custom_call.1} parent=11 // pred_check_branch
          %268 = sbr.rel (%p266) target = $region16
        $region15: #{tpu_custom_call.1} parent=11 // pred_region
          _
        $region16: #{tpu_custom_call.1} parent=11 // pred_fallthru
          _
        // Predicated region
        $region17: #{tpu_custom_call.1} parent=11 // pred_check
          %p269 = pneg %p181
        $region18: #{tpu_custom_call.1} parent=11 // pred_check_branch
          %271 = sbr.rel (%p269) target = $region20
        $region19: #{tpu_custom_call.1} parent=11 // pred_region
          _
        $region20: #{tpu_custom_call.1} parent=11 // pred_fallthru
          _
        // Predicated region
        $region21: #{tpu_custom_call.1} parent=11 // pred_check
          %p272 = pneg %p202
        $region22: #{tpu_custom_call.1} parent=11 // pred_check_branch
          %274 = sbr.rel (%p272) target = $region24
        $region23: #{tpu_custom_call.1} parent=11 // pred_region
          _
        $region24: #{tpu_custom_call.1} parent=11 // pred_fallthru
          _
        // Predicated region
        $region25: #{tpu_custom_call.1} parent=11 // pred_check
          %p275 = pneg %p223
        $region26: #{tpu_custom_call.1} parent=11 // pred_check_branch
          %277 = sbr.rel (%p275) target = $region28
        $region27: #{tpu_custom_call.1} parent=11 // pred_region
          _
        $region28: #{tpu_custom_call.1} parent=11 // pred_fallthru
          _
      $region12: #{tpu_custom_call.1} parent=5 // pred_fallthru
        _
      %p278 = scmp.lt.s32.totalorder %s25, 6
      // Predicated region
      $region29: #{tpu_custom_call.1} parent=5 // pred_check
        %p279 = pneg %p278
      $region30: #{tpu_custom_call.1} parent=5 // pred_check_branch
        %281 = sbr.rel (%p279) target = $region32
      $region31: #{tpu_custom_call.1} parent=5 // pred_region
        // Predicated region
        $region33: #{tpu_custom_call.1} parent=31 // pred_check
          %p282 = pneg %p75
        $region34: #{tpu_custom_call.1} parent=31 // pred_check_branch
          %284 = sbr.rel (%p282) target = $region36
        $region35: #{tpu_custom_call.1} parent=31 // pred_region
          %p285 = scmp.lt.s32.totalorder %s34, 2
          %s286 = scalar_select %p285, %s34, 2
          %p287 = scmp.lt.s32.totalorder %s32, 1
          %s288 = scalar_select %p287, %s32, 1
          %p289 = scmp.lt.s32.totalorder %s33, 0
          %s290 = scalar_select %p289, %s33, 0
          %s291 = smul.addr %s288, 2
          %s292 = sadd.s32 %s290, %s291
          %s293 = smul.addr %s286, 4
          %s294 = sadd.s32 %s292, %s293
          %s295 = smul.addr %s294, 4
          %s296 = scalar_lea.vmem %s1, %s295
        $region36: #{tpu_custom_call.1} parent=31 // pred_fallthru
          _
        // Predicated region
        $region37: #{tpu_custom_call.1} parent=31 // pred_check
          %p297 = pneg %p133
        $region38: #{tpu_custom_call.1} parent=31 // pred_check_branch
          %299 = sbr.rel (%p297) target = $region40
        $region39: #{tpu_custom_call.1} parent=31 // pred_region
          %s300 = sand.u32 %s123, 1
          %s301 = scalar_lea.sflag [#allocation9], %s300
          %s302 = sand.u32 %s123, 1
          %s303 = smul.addr %s302, 8
          %s304 = scalar_lea.vmem [#allocation8], %s303
          %s305 = sadd.s32 %s34, 1
          %p306 = scmp.lt.s32.totalorder %s305, 0
          %s307 = ssub.s32 0, %s305
          %s308 = scalar_select %p306, %s307, %s305
          %s309 = sdiv.u32.pop %s308, 3
          %s310 = srem.u32.pop %s308, 3
          %s311 = ssub.s32 0, %s310
          %s312 = scalar_select %p306, %s311, %s310
          %p313 = scmp.ne.s32.totalorder %s312, 0
          %p314 = scmp.lt.s32.totalorder %s312, 0
          %p315 = pnand %p314, %p313
          %p316 = pneg %p315
          %s317 = sadd.s32 %s312, 3
          %s318 = scalar_select %p316, %s317, %s312
          %s320 = ssub.s32 128, 128
          %321 = vsyncadd %s301, %s320
          %s322 = smul.addr %s32, 2
          %s323 = sadd.s32 %s35, %s322
          %s324 = smul.addr %s318, 4
          %s325 = sadd.s32 %s323, %s324
          %s326 = smul.addr %s325, 64
          %s327 = scalar_lea.hbm %s2, %s326
          %s328 = sshll.u32 %s304, 4
          %s329 = int_to_ptr.vmem [resolvable:$true] %s328
          %334 = dma.hbm_to_vmem [thread:$0]  %s327, 128, %s329, %s301, 64, 64, 4
        $region40: #{tpu_custom_call.1} parent=31 // pred_fallthru
          _
      $region32: #{tpu_custom_call.1} parent=5 // pred_fallthru
        _
      %p335 = scmp.le.s32.totalorder 1, %s25
      %p336 = scmp.lt.s32.totalorder %s25, 7
      %p337 = pnand %p335, %p336
      %p338 = pneg %p337
      // Predicated region
      $region41: #{tpu_custom_call.1} parent=5 // pred_check
        _
      $region42: #{tpu_custom_call.1} parent=5 // pred_check_branch
        %340 = sbr.rel (%p337) target = $region44
      $region43: #{tpu_custom_call.1} parent=5 // pred_region
        %s341 = ssub.s32 %s25, 1
        %s342 = sand.u32 %s126, 1
        %s343 = scalar_lea.sflag [#allocation9], %s342
        %s344 = sand.u32 %s126, 1
        %s345 = smul.addr %s344, 8
        %s346 = scalar_lea.vmem [#allocation8], %s345
        // Predicated region
        $region45: #{tpu_custom_call.1} parent=43 // pred_check
          %p347 = pneg %p139
        $region46: #{tpu_custom_call.1} parent=43 // pred_check_branch
          %349 = sbr.rel (%p347) target = $region48
        $region47: #{tpu_custom_call.1} parent=43 // pred_region
          %350 = dma.done %s343, 128
        $region48: #{tpu_custom_call.1} parent=43 // pred_fallthru
          _
        %p351 = scmp.lt.s32.totalorder %s38, 2
        %s352 = scalar_select %p351, %s38, 2
        %p353 = scmp.lt.s32.totalorder %s36, 1
        %s354 = scalar_select %p353, %s36, 1
        %p355 = scmp.lt.s32.totalorder %s37, 0
        %s356 = scalar_select %p355, %s37, 0
        %s357 = smul.addr %s354, 2
        %s358 = sadd.s32 %s356, %s357
        %s359 = smul.addr %s352, 4
        %s360 = sadd.s32 %s358, %s359
        %s361 = smul.addr %s360, 4
        %s362 = scalar_lea.vmem %s1, %s361
        %p363 = pneg %p81
        %p364 = pneg %p78
        %s365 = sand.u32 %s126, 1
        %s366 = scalar_lea.sflag [#allocation9], %s365
        %s367 = sand.u32 %s126, 1
        %s368 = smul.addr %s367, 8
        %s369 = scalar_lea.vmem [#allocation8], %s368
        %p370 = pneg %p139
        %p371 = pneg %p136
        %p372 = pneg %p160
        %p373 = pneg %p157
        %p374 = pneg %p181
        %p375 = pneg %p178
        %p376 = pneg %p202
        %p377 = pneg %p199
        %p378 = pneg %p223
        %p379 = pneg %p220
        %p380 = pneg %p251
        %p381 = pneg %p248
        %s382 = sand.u32 %s238, 1
        %s383 = scalar_lea.sflag [#allocation10], %s382
        %s384 = sand.u32 %s238, 1
        %s385 = smul.addr %s384, 16
        %s386 = scalar_lea.vmem [#allocation11], %s385
        %p387 = scmp.lt.s32.totalorder %s38, 2
        %s388 = scalar_select %p387, %s38, 2
        %p389 = scmp.lt.s32.totalorder %s36, 1
        %s390 = scalar_select %p389, %s36, 1
        %p391 = scmp.lt.s32.totalorder %s37, 0
        %s392 = scalar_select %p391, %s37, 0
        %s393 = smul.addr %s390, 2
        %s394 = sadd.s32 %s392, %s393
        %s395 = smul.addr %s388, 4
        %s396 = sadd.s32 %s394, %s395
        %s397 = smul.addr %s396, 4
        %s398 = scalar_lea.vmem %s1, %s397
        %s399 = sadd.s32 %s38, 1
        %p400 = scmp.lt.s32.totalorder %s399, 0
        %s401 = ssub.s32 0, %s399
        %s402 = scalar_select %p400, %s401, %s399
        %s403 = sdiv.u32.pop %s402, 3
        %s404 = srem.u32.pop %s402, 3
        %s405 = ssub.s32 0, %s404
        %s406 = scalar_select %p400, %s405, %s404
        %p407 = scmp.ne.s32.totalorder %s406, 0
        %p408 = scmp.lt.s32.totalorder %s406, 0
        %p409 = pnand %p408, %p407
        %p410 = pneg %p409
        %s411 = sadd.s32 %s406, 3
        %s412 = scalar_select %p410, %s411, %s406
        %p414 = scmp.eq.s32.totalorder %s38, 0
        %p415 = scmp.eq.s32.totalorder %s39, 0
        %p416 = pnand %p414, %p415
        %p417 = pneg %p416
        // Predicated region
        $region49: #{tpu_custom_call.1} parent=43 // pred_check
          _
        $region50: #{tpu_custom_call.1} parent=43 // pred_check_branch
          %419 = sbr.rel (%p416) target = $region52
        $region51: #{tpu_custom_call.1} parent=43 // pred_region
          %420 = vst [vmem:[%s386] sm:$0xff] 0.0
          %421 = vst [vmem:[%s386 + $0x8] sm:$0xff] 0.0
        $region52: #{tpu_custom_call.1} parent=43 // pred_fallthru
          _
        // Predicated region
        $region53: #{tpu_custom_call.1} parent=43 // pred_check
          %p422 = pneg %p415
        $region54: #{tpu_custom_call.1} parent=43 // pred_check_branch
          %424 = sbr.rel (%p422) target = $region56
        $region55: #{tpu_custom_call.1} parent=43 // pred_region
          %425 = vst [vmem:[#allocation3] sm:$0x1] -1e+30
          %426 = vst [vmem:[#allocation4] sm:$0x1] 0.0
          %427 = vst [vmem:[#allocation5] sm:$0xff] 0.0
          %428 = vst [vmem:[#allocation5 + $0x8] sm:$0xff] 0.0
          %v429 = vld [vmem:[%s3] sm:$0xf]
          %v430 = vld [vmem:[%s3 + $0x4] sm:$0xf]
          %v431 = vld [vmem:[%s398] sm:$0xf]
          %v432 = vld [vmem:[%s398 + $0x4] sm:$0xf]
          %v433 = vld [vmem:[%s5] sm:$0xff]
          %v434 = vld [vmem:[%s5 + $0x8] sm:$0xff]
          %436 = vset.pattern.permute.xlu0 0
          %437 = vperm.xlu0 %436, %v433
          %v438 = vpop.permute.xlu0 %437
          %441 = vset.pattern.permute.xlu0 0
          %442 = vperm.xlu0 %441, %v434
          %v443 = vpop.permute.xlu0 %442
          %v447 = vunpack.c.l.b16 %v429
          %v448 = vunpack.c.l.b16 %v430
          %v449 = vpack.c.b16 %v448, %v447
          %v452 = vunpack.c.l.b16 %v431
          %v453 = vunpack.c.l.b16 %v432
          %v454 = vpack.c.b16 %v453, %v452
          %vm456 = vcmask 130048
          %v458 = vsel %vm456, %v449, 0
          %460 = vmatprep.subr.bf16.mxu0 0
          %461 = vmatpush1.bf16.msra.mxu0 0
          %462 = vmatprep.subr.bf16.mxu0 0
          %463 = vmatpush1.bf16.msra.mxu0 0
          %464 = vmatprep.subr.bf16.mxu0 0
          %465 = vmatpush1.bf16.msra.mxu0 0
          %466 = vmatprep.subr.bf16.mxu0 0
          %467 = vmatpush1.bf16.msra.mxu0 0
          %468 = vmatprep.subr.bf16.mxu0 0
          %469 = vmatpush1.bf16.msra.mxu0 0
          %470 = vmatprep.subr.bf16.mxu0 0
          %471 = vmatpush1.bf16.msra.mxu0 0
          %472 = vmatprep.subr.bf16.mxu0 0
          %473 = vmatpush1.bf16.msra.mxu0 0
          %474 = vmatprep.subr.bf16.mxu0 0
          %475 = vmatpush1.bf16.msra.mxu0 %v454
          %476 = vmatprep.subr.bf16.mxu0 0
          %477 = vmatpush2.bf16.msra.mxu0 0
          %478 = vmatprep.subr.bf16.mxu0 0
          %479 = vmatpush2.bf16.msra.mxu0 0
          %480 = vmatprep.subr.bf16.mxu0 0
          %481 = vmatpush2.bf16.msra.mxu0 0
          %482 = vmatprep.subr.bf16.mxu0 0
          %483 = vmatpush2.bf16.msra.mxu0 0
          %484 = vmatprep.subr.bf16.mxu0 0
          %485 = vmatpush2.bf16.msra.mxu0 0
          %486 = vmatprep.subr.bf16.mxu0 0
          %487 = vmatpush2.bf16.msra.mxu0 0
          %488 = vmatprep.subr.bf16.mxu0 0
          %489 = vmatpush2.bf16.msra.mxu0 0
          %490 = vmatprep.subr.bf16.mxu0 0
          %491 = vmatpush2.bf16.msra.mxu0 0
          %492 = vmatprep.mubr.bf16.mxu0 0
          %493 = vmatmul.mubr.bf16.gmra.mxu0 %v458
          %v494 = vpop.f32.mrf.mxu0
          %v495 = vadd.f32 %v438, %v494
          %v496 = vpop.f32.mrf.mxu0
          %v497 = vpop.f32.mrf.mxu0
          %v498 = vadd.f32 %v443, %v497
          %v499 = vpop.f32.mrf.mxu0
          %500 = vdwg.mxu0
          %v501 = vpack.c.bf16 %v498, %v495
          %v503 = vunpack.c.l.b16 %v501
          %v504 = vunpack.c.h.b16 %v501
          %v505 = vpack.c.b16 %v503, %v503
          %v506 = vpack.c.b16 %v504, %v504
          %509 = vst [vmem:[#allocation2] sm:$0xf] %v505
          %510 = vst [vmem:[#allocation2 + $0x4] sm:$0xf] %v506
        $region56: #{tpu_custom_call.1} parent=43 // pred_fallthru
          _
        %v511 = vld [vmem:[%s4] sm:$0xf]
        %v512 = vld [vmem:[%s4 + $0x4] sm:$0xf]
        %v513 = vld [vmem:[%s4 + $0x8] sm:$0xf]
        %v514 = vld [vmem:[%s4 + $0xc] sm:$0xf]
        %v515 = vld [vmem:[%s346] sm:$0xf]
        %v516 = vld [vmem:[%s346 + $0x4] sm:$0xf]
        %v517 = vld [vmem:[%s6] sm:$0xff]
        %v518 = vld [vmem:[%s6 + $0x8] sm:$0xff]
        %v519 = vld [vmem:[%s6 + $0x10] sm:$0xff]
        %v520 = vld [vmem:[%s6 + $0x18] sm:$0xff]
        %522 = vset.pattern.permute.xlu0 0
        %523 = vperm.xlu0 %522, %v517
        %v524 = vpop.permute.xlu0 %523
        %527 = vset.pattern.permute.xlu0 0
        %528 = vperm.xlu0 %527, %v518
        %v529 = vpop.permute.xlu0 %528
        %532 = vset.pattern.permute.xlu0 0
        %533 = vperm.xlu0 %532, %v519
        %v534 = vpop.permute.xlu0 %533
        %537 = vset.pattern.permute.xlu0 0
        %538 = vperm.xlu0 %537, %v520
        %v539 = vpop.permute.xlu0 %538
        %v545 = vunpack.c.l.b16 %v511
        %v546 = vunpack.c.l.b16 %v512
        %v547 = vunpack.c.l.b16 %v513
        %v548 = vunpack.c.l.b16 %v514
        %v549 = vpack.c.b16 %v546, %v545
        %v550 = vpack.c.b16 %v548, %v547
        %v553 = vunpack.c.l.b16 %v515
        %v554 = vunpack.c.l.b16 %v516
        %v555 = vpack.c.b16 %v554, %v553
        %vm557 = vcmask 130048
        %v559 = vsel %vm557, %v549, 0
        %v562 = vsel %vm557, %v550, 0
        %564 = vmatprep.subr.bf16.mxu0 0
        %565 = vmatpush1.bf16.msra.mxu0 0
        %566 = vmatprep.subr.bf16.mxu0 0
        %567 = vmatpush1.bf16.msra.mxu0 0
        %568 = vmatprep.subr.bf16.mxu0 0
        %569 = vmatpush1.bf16.msra.mxu0 0
        %570 = vmatprep.subr.bf16.mxu0 0
        %571 = vmatpush1.bf16.msra.mxu0 0
        %572 = vmatprep.subr.bf16.mxu0 0
        %573 = vmatpush1.bf16.msra.mxu0 0
        %574 = vmatprep.subr.bf16.mxu0 0
        %575 = vmatpush1.bf16.msra.mxu0 0
        %576 = vmatprep.subr.bf16.mxu0 0
        %577 = vmatpush1.bf16.msra.mxu0 0
        %578 = vmatprep.subr.bf16.mxu0 0
        %579 = vmatpush1.bf16.msra.mxu0 %v555
        %580 = vmatprep.subr.bf16.mxu0 0
        %581 = vmatpush2.bf16.msra.mxu0 0
        %582 = vmatprep.subr.bf16.mxu0 0
        %583 = vmatpush2.bf16.msra.mxu0 0
        %584 = vmatprep.subr.bf16.mxu0 0
        %585 = vmatpush2.bf16.msra.mxu0 0
        %586 = vmatprep.subr.bf16.mxu0 0
        %587 = vmatpush2.bf16.msra.mxu0 0
        %588 = vmatprep.subr.bf16.mxu0 0
        %589 = vmatpush2.bf16.msra.mxu0 0
        %590 = vmatprep.subr.bf16.mxu0 0
        %591 = vmatpush2.bf16.msra.mxu0 0
        %592 = vmatprep.subr.bf16.mxu0 0
        %593 = vmatpush2.bf16.msra.mxu0 0
        %594 = vmatprep.subr.bf16.mxu0 0
        %595 = vmatpush2.bf16.msra.mxu0 0
        %596 = vmatprep.mubr.bf16.mxu0 0
        %597 = vmatmul.mubr.bf16.gmra.mxu0 %v559
        %v598 = vpop.f32.mrf.mxu0
        %v599 = vadd.f32 %v524, %v598
        %v600 = vpop.f32.mrf.mxu0
        %v601 = vpop.f32.mrf.mxu0
        %v602 = vadd.f32 %v529, %v601
        %v603 = vpop.f32.mrf.mxu0
        %604 = vmatprep.mubr.bf16.mxu0 0
        %605 = vmatmul.mubr.bf16.gmra.mxu0 %v562
        %v606 = vpop.f32.mrf.mxu0
        %v607 = vadd.f32 %v534, %v606
        %v608 = vpop.f32.mrf.mxu0
        %v609 = vpop.f32.mrf.mxu0
        %v610 = vadd.f32 %v539, %v609
        %v611 = vpop.f32.mrf.mxu0
        %612 = vdwg.mxu0
        %v613 = vpack.c.bf16 %v602, %v599
        %v614 = vpack.c.bf16 %v610, %v607
        %v615 = vld [vmem:[#allocation2] sm:$0xf]
        %v616 = vld [vmem:[#allocation2 + $0x4] sm:$0xf]
        %617 = vxpose.xlu0.c.b16.start [1/8] %v613, 128
        %618 = vxpose.xlu0.c.b16.cont [2/8] 0, 128
        %619 = vxpose.xlu0.c.b16.cont [3/8] 0, 128
        %620 = vxpose.xlu0.c.b16.cont [4/8] 0, 128
        %621 = vxpose.xlu0.c.b16.cont [5/8] 0, 128
        %622 = vxpose.xlu0.c.b16.cont [6/8] 0, 128
        %623 = vxpose.xlu0.c.b16.cont [7/8] 0, 128
        %624 = vxpose.xlu0.c.b16.end [8/8] 0, 128
        %v625 = vpop.trf.xlu0
        %v626 = vpop.trf.xlu0
        %v627 = vpop.trf.xlu0
        %v628 = vpop.trf.xlu0
        %v629 = vpop.trf.xlu0
        %v630 = vpop.trf.xlu0
        %v631 = vpop.trf.xlu0
        %v632 = vpop.trf.xlu0
        %v635 = vunpack.c.l.b16 %v615
        %v636 = vunpack.c.l.b16 %v616
        %v637 = vpack.c.b16 %v636, %v635
        %v640 = vsel %vm557, %v625, 0
        %v643 = vsel %vm557, %v626, 0
        %v646 = vsel %vm557, %v627, 0
        %v649 = vsel %vm557, %v628, 0
        %v652 = vsel %vm557, %v629, 0
        %v655 = vsel %vm557, %v630, 0
        %v658 = vsel %vm557, %v631, 0
        %v661 = vsel %vm557, %v632, 0
        %663 = vmatprep.subr.bf16.mxu0 0
        %664 = vmatpush1.bf16.msra.mxu0 0
        %665 = vmatprep.subr.bf16.mxu0 0
        %666 = vmatpush1.bf16.msra.mxu0 0
        %667 = vmatprep.subr.bf16.mxu0 0
        %668 = vmatpush1.bf16.msra.mxu0 0
        %669 = vmatprep.subr.bf16.mxu0 0
        %670 = vmatpush1.bf16.msra.mxu0 0
        %671 = vmatprep.subr.bf16.mxu0 0
        %672 = vmatpush1.bf16.msra.mxu0 0
        %673 = vmatprep.subr.bf16.mxu0 0
        %674 = vmatpush1.bf16.msra.mxu0 0
        %675 = vmatprep.subr.bf16.mxu0 0
        %676 = vmatpush1.bf16.msra.mxu0 0
        %677 = vmatprep.subr.bf16.mxu0 0
        %678 = vmatpush1.bf16.msra.mxu0 %v637
        %679 = vmatprep.subr.bf16.mxu0 0
        %680 = vmatpush2.bf16.msra.mxu0 0
        %681 = vmatprep.subr.bf16.mxu0 0
        %682 = vmatpush2.bf16.msra.mxu0 0
        %683 = vmatprep.subr.bf16.mxu0 0
        %684 = vmatpush2.bf16.msra.mxu0 0
        %685 = vmatprep.subr.bf16.mxu0 0
        %686 = vmatpush2.bf16.msra.mxu0 0
        %687 = vmatprep.subr.bf16.mxu0 0
        %688 = vmatpush2.bf16.msra.mxu0 0
        %689 = vmatprep.subr.bf16.mxu0 0
        %690 = vmatpush2.bf16.msra.mxu0 0
        %691 = vmatprep.subr.bf16.mxu0 0
        %692 = vmatpush2.bf16.msra.mxu0 0
        %693 = vmatprep.subr.bf16.mxu0 0
        %694 = vmatpush2.bf16.msra.mxu0 0
        %695 = vmatprep.mubr.bf16.mxu0 0
        %696 = vmatmul.mubr.bf16.gmra.mxu0 %v640
        %v697 = vpop.f32.mrf.mxu0
        %v698 = vadd.f32 0.0, %v697
        %v699 = vpop.f32.mrf.mxu0
        %v700 = vpop.f32.mrf.mxu0
        %v701 = vadd.f32 0.0, %v700
        %v702 = vpop.f32.mrf.mxu0
        %703 = vmatprep.mubr.bf16.mxu0 0
        %704 = vmatmul.mubr.bf16.gmra.mxu0 %v643
        %v705 = vpop.f32.mrf.mxu0
        %v706 = vadd.f32 0.0, %v705
        %v707 = vpop.f32.mrf.mxu0
        %v708 = vpop.f32.mrf.mxu0
        %v709 = vadd.f32 0.0, %v708
        %v710 = vpop.f32.mrf.mxu0
        %711 = vmatprep.mubr.bf16.mxu0 0
        %712 = vmatmul.mubr.bf16.gmra.mxu0 %v646
        %v713 = vpop.f32.mrf.mxu0
        %v714 = vadd.f32 0.0, %v713
        %v715 = vpop.f32.mrf.mxu0
        %v716 = vpop.f32.mrf.mxu0
        %v717 = vadd.f32 0.0, %v716
        %v718 = vpop.f32.mrf.mxu0
        %719 = vmatprep.mubr.bf16.mxu0 0
        %720 = vmatmul.mubr.bf16.gmra.mxu0 %v649
        %v721 = vpop.f32.mrf.mxu0
        %v722 = vadd.f32 0.0, %v721
        %v723 = vpop.f32.mrf.mxu0
        %v724 = vpop.f32.mrf.mxu0
        %v725 = vadd.f32 0.0, %v724
        %v726 = vpop.f32.mrf.mxu0
        %727 = vmatprep.mubr.bf16.mxu0 0
        %728 = vmatmul.mubr.bf16.gmra.mxu0 %v652
        %v729 = vpop.f32.mrf.mxu0
        %v730 = vadd.f32 0.0, %v729
        %v731 = vpop.f32.mrf.mxu0
        %v732 = vpop.f32.mrf.mxu0
        %v733 = vadd.f32 0.0, %v732
        %v734 = vpop.f32.mrf.mxu0
        %735 = vmatprep.mubr.bf16.mxu0 0
        %736 = vmatmul.mubr.bf16.gmra.mxu0 %v655
        %v737 = vpop.f32.mrf.mxu0
        %v738 = vadd.f32 0.0, %v737
        %v739 = vpop.f32.mrf.mxu0
        %v740 = vpop.f32.mrf.mxu0
        %v741 = vadd.f32 0.0, %v740
        %v742 = vpop.f32.mrf.mxu0
        %743 = vmatprep.mubr.bf16.mxu0 0
        %744 = vmatmul.mubr.bf16.gmra.mxu0 %v658
        %v745 = vpop.f32.mrf.mxu0
        %v746 = vadd.f32 0.0, %v745
        %v747 = vpop.f32.mrf.mxu0
        %v748 = vpop.f32.mrf.mxu0
        %v749 = vadd.f32 0.0, %v748
        %v750 = vpop.f32.mrf.mxu0
        %751 = vmatprep.mubr.bf16.mxu0 0
        %752 = vmatmul.mubr.bf16.gmra.mxu0 %v661
        %v753 = vpop.f32.mrf.mxu0
        %v754 = vadd.f32 0.0, %v753
        %v755 = vpop.f32.mrf.mxu0
        %v756 = vpop.f32.mrf.mxu0
        %v757 = vadd.f32 0.0, %v756
        %v758 = vpop.f32.mrf.mxu0
        %759 = vdwg.mxu0
        %s760 = smul.u32 %s39, 128
        %v761 = vlaneseq
        %v762 = vshrl.u32 %v761, 7
        %v763 = vadd.s32 %v762, 8
        %v764 = vadd.s32 %v762, 16
        %v765 = vadd.s32 %v762, 24
        %v766 = vadd.s32 %v762, 32
        %v767 = vadd.s32 %v762, 40
        %v768 = vadd.s32 %v762, 48
        %v769 = vadd.s32 %v762, 56
        %v770 = vadd.s32 %v762, 64
        %v771 = vadd.s32 %v762, 72
        %v772 = vadd.s32 %v762, 80
        %v773 = vadd.s32 %v762, 88
        %v774 = vadd.s32 %v762, 96
        %v775 = vadd.s32 %v762, 104
        %v776 = vadd.s32 %v762, 112
        %v777 = vadd.s32 %v762, 120
        %v778 = vstv %s760
        %v779 = vadd.s32 %v778, %v762
        %v780 = vadd.s32 %v778, %v763
        %v781 = vadd.s32 %v778, %v764
        %v782 = vadd.s32 %v778, %v765
        %v783 = vadd.s32 %v778, %v766
        %v784 = vadd.s32 %v778, %v767
        %v785 = vadd.s32 %v778, %v768
        %v786 = vadd.s32 %v778, %v769
        %v787 = vadd.s32 %v778, %v770
        %v788 = vadd.s32 %v778, %v771
        %v789 = vadd.s32 %v778, %v772
        %v790 = vadd.s32 %v778, %v773
        %v791 = vadd.s32 %v778, %v774
        %v792 = vadd.s32 %v778, %v775
        %v793 = vadd.s32 %v778, %v776
        %v794 = vadd.s32 %v778, %v777
        %vm795 = vcmp.lt.s32.totalorder %v779, 64
        %vm796 = vcmp.lt.s32.totalorder %v780, 64
        %vm797 = vcmp.lt.s32.totalorder %v781, 64
        %vm798 = vcmp.lt.s32.totalorder %v782, 64
        %vm799 = vcmp.lt.s32.totalorder %v783, 64
        %vm800 = vcmp.lt.s32.totalorder %v784, 64
        %vm801 = vcmp.lt.s32.totalorder %v785, 64
        %vm802 = vcmp.lt.s32.totalorder %v786, 64
        %vm803 = vcmp.lt.s32.totalorder %v787, 64
        %vm804 = vcmp.lt.s32.totalorder %v788, 64
        %vm805 = vcmp.lt.s32.totalorder %v789, 64
        %vm806 = vcmp.lt.s32.totalorder %v790, 64
        %vm807 = vcmp.lt.s32.totalorder %v791, 64
        %vm808 = vcmp.lt.s32.totalorder %v792, 64
        %vm809 = vcmp.lt.s32.totalorder %v793, 64
        %vm810 = vcmp.lt.s32.totalorder %v794, 64
        %v811 = vsel %vm795, %v698, -1e+30
        %v812 = vsel %vm796, %v701, -1e+30
        %v813 = vsel %vm797, %v706, -1e+30
        %v814 = vsel %vm798, %v709, -1e+30
        %v815 = vsel %vm799, %v714, -1e+30
        %v816 = vsel %vm800, %v717, -1e+30
        %v817 = vsel %vm801, %v722, -1e+30
        %v818 = vsel %vm802, %v725, -1e+30
        %v819 = vsel %vm803, %v730, -1e+30
        %v820 = vsel %vm804, %v733, -1e+30
        %v821 = vsel %vm805, %v738, -1e+30
        %v822 = vsel %vm806, %v741, -1e+30
        %v823 = vsel %vm807, %v746, -1e+30
        %v824 = vsel %vm808, %v749, -1e+30
        %v825 = vsel %vm809, %v754, -1e+30
        %v826 = vsel %vm810, %v757, -1e+30
        %v827 = vld [vmem:[#allocation3] sm:$0x1]
        %v828 = vmax.f32 %v811, %v815
        %v829 = vmax.f32 %v812, %v816
        %v830 = vmax.f32 %v813, %v817
        %v831 = vmax.f32 %v814, %v818
        %v832 = vmax.f32 %v828, %v819
        %v833 = vmax.f32 %v829, %v820
        %v834 = vmax.f32 %v830, %v821
        %v835 = vmax.f32 %v831, %v822
        %v836 = vmax.f32 %v832, %v823
        %v837 = vmax.f32 %v833, %v824
        %v838 = vmax.f32 %v834, %v825
        %v839 = vmax.f32 %v835, %v826
        %v840 = vmax.f32 %v836, %v837
        %v841 = vmax.f32 %v838, %v839
        %v842 = vmax.f32 %v840, %v841
        %v843 = vrot.slane %v842, 4
        %v844 = vmax.f32 %v842, %v843
        %v845 = vrot.slane %v844, 2
        %v846 = vmax.f32 %v844, %v845
        %v847 = vrot.slane %v846, 1
        %v848 = vmax.f32 %v846, %v847
        %v849 = vmax.f32 %v827, %v848
        %v850 = vsub.f32 %v827, %v849
        %v851 = vmul.f32 %v850, 1.442695
        %v852 = vpow.pop %v851
        %v854 = vlaneseq
        %v855 = vshrl.u32 %v854, 7
        %v856 = vsub.s32 0, %v855
        %v857 = vrot.slane %v849, %v856
        %v859 = vsub.f32 %v811, %v857
        %v860 = vsub.f32 %v812, %v857
        %v861 = vsub.f32 %v813, %v857
        %v862 = vsub.f32 %v814, %v857
        %v863 = vsub.f32 %v815, %v857
        %v864 = vsub.f32 %v816, %v857
        %v865 = vsub.f32 %v817, %v857
        %v866 = vsub.f32 %v818, %v857
        %v867 = vsub.f32 %v819, %v857
        %v868 = vsub.f32 %v820, %v857
        %v869 = vsub.f32 %v821, %v857
        %v870 = vsub.f32 %v822, %v857
        %v871 = vsub.f32 %v823, %v857
        %v872 = vsub.f32 %v824, %v857
        %v873 = vsub.f32 %v825, %v857
        %v874 = vsub.f32 %v826, %v857
        %v875 = vmul.f32 %v859, 1.442695
        %v876 = vpow.pop %v875
        %v877 = vmul.f32 %v860, 1.442695
        %v878 = vpow.pop %v877
        %v879 = vmul.f32 %v861, 1.442695
        %v880 = vpow.pop %v879
        %v881 = vmul.f32 %v862, 1.442695
        %v882 = vpow.pop %v881
        %v883 = vmul.f32 %v863, 1.442695
        %v884 = vpow.pop %v883
        %v885 = vmul.f32 %v864, 1.442695
        %v886 = vpow.pop %v885
        %v887 = vmul.f32 %v865, 1.442695
        %v888 = vpow.pop %v887
        %v889 = vmul.f32 %v866, 1.442695
        %v890 = vpow.pop %v889
        %v891 = vmul.f32 %v867, 1.442695
        %v892 = vpow.pop %v891
        %v893 = vmul.f32 %v868, 1.442695
        %v894 = vpow.pop %v893
        %v895 = vmul.f32 %v869, 1.442695
        %v896 = vpow.pop %v895
        %v897 = vmul.f32 %v870, 1.442695
        %v898 = vpow.pop %v897
        %v899 = vmul.f32 %v871, 1.442695
        %v900 = vpow.pop %v899
        %v901 = vmul.f32 %v872, 1.442695
        %v902 = vpow.pop %v901
        %v903 = vmul.f32 %v873, 1.442695
        %v904 = vpow.pop %v903
        %v905 = vmul.f32 %v874, 1.442695
        %v906 = vpow.pop %v905
        %v907 = vld [vmem:[#allocation4] sm:$0x1]
        %v908 = vmul.f32 %v852, %v907
        %v909 = vadd.f32 %v876, %v878
        %v910 = vadd.f32 %v909, %v880
        %v911 = vadd.f32 %v910, %v882
        %v912 = vadd.f32 %v911, %v884
        %v913 = vadd.f32 %v912, %v886
        %v914 = vadd.f32 %v913, %v888
        %v915 = vadd.f32 %v914, %v890
        %v916 = vadd.f32 %v915, %v892
        %v917 = vadd.f32 %v916, %v894
        %v918 = vadd.f32 %v917, %v896
        %v919 = vadd.f32 %v918, %v898
        %v920 = vadd.f32 %v919, %v900
        %v921 = vadd.f32 %v920, %v902
        %v922 = vadd.f32 %v921, %v904
        %v923 = vadd.f32 %v922, %v906
        %v924 = vrot.slane %v923, 4
        %v925 = vadd.f32 %v923, %v924
        %v926 = vrot.slane %v925, 2
        %v927 = vadd.f32 %v925, %v926
        %v928 = vrot.slane %v927, 1
        %v929 = vadd.f32 %v927, %v928
        %v930 = vadd.f32 %v908, %v929
        %931 = vst [vmem:[#allocation4] sm:$0x1] %v930
        %932 = vst [vmem:[#allocation3] sm:$0x1] %v849
        %v933 = vpack.c.bf16 %v878, %v876
        %v934 = vpack.c.bf16 %v882, %v880
        %v935 = vpack.c.bf16 %v886, %v884
        %v936 = vpack.c.bf16 %v890, %v888
        %v937 = vpack.c.bf16 %v894, %v892
        %v938 = vpack.c.bf16 %v898, %v896
        %v939 = vpack.c.bf16 %v902, %v900
        %v940 = vpack.c.bf16 %v906, %v904
        %941 = vmatprep.subr.bf16.mxu0 0
        %942 = vmatpush1.bf16.msra.mxu0 %v940
        %943 = vmatprep.subr.bf16.mxu0 0
        %944 = vmatpush1.bf16.msra.mxu0 %v939
        %945 = vmatprep.subr.bf16.mxu0 0
        %946 = vmatpush1.bf16.msra.mxu0 %v938
        %947 = vmatprep.subr.bf16.mxu0 0
        %948 = vmatpush1.bf16.msra.mxu0 %v937
        %949 = vmatprep.subr.bf16.mxu0 0
        %950 = vmatpush1.bf16.msra.mxu0 %v936
        %951 = vmatprep.subr.bf16.mxu0 0
        %952 = vmatpush1.bf16.msra.mxu0 %v935
        %953 = vmatprep.subr.bf16.mxu0 0
        %954 = vmatpush1.bf16.msra.mxu0 %v934
        %955 = vmatprep.subr.bf16.mxu0 0
        %956 = vmatpush1.bf16.msra.mxu0 %v933
        %957 = vmatprep.subr.bf16.mxu0 0
        %958 = vmatpush2.bf16.msra.mxu0 0
        %959 = vmatprep.subr.bf16.mxu0 0
        %960 = vmatpush2.bf16.msra.mxu0 0
        %961 = vmatprep.subr.bf16.mxu0 0
        %962 = vmatpush2.bf16.msra.mxu0 0
        %963 = vmatprep.subr.bf16.mxu0 0
        %964 = vmatpush2.bf16.msra.mxu0 0
        %965 = vmatprep.subr.bf16.mxu0 0
        %966 = vmatpush2.bf16.msra.mxu0 0
        %967 = vmatprep.subr.bf16.mxu0 0
        %968 = vmatpush2.bf16.msra.mxu0 0
        %969 = vmatprep.subr.bf16.mxu0 0
        %970 = vmatpush2.bf16.msra.mxu0 0
        %971 = vmatprep.subr.bf16.mxu0 0
        %972 = vmatpush2.bf16.msra.mxu0 0
        %973 = vmatprep.mubr.bf16.mxu0 0
        %974 = vmatmul.mubr.bf16.gmra.mxu0 %v614
        %v975 = vpop.f32.mrf.mxu0
        %v976 = vadd.f32 0.0, %v975
        %v977 = vpop.f32.mrf.mxu0
        %v978 = vpop.f32.mrf.mxu0
        %v979 = vadd.f32 0.0, %v978
        %v980 = vpop.f32.mrf.mxu0
        %981 = vdwg.mxu0
        %v982 = vld [vmem:[#allocation5] sm:$0xff]
        %v983 = vld [vmem:[#allocation5 + $0x8] sm:$0xff]
        %v985 = vlaneseq
        %v986 = vshrl.u32 %v985, 7
        %v987 = vsub.s32 0, %v986
        %v988 = vrot.slane %v852, %v987
        %v990 = vmul.f32 %v982, %v988
        %v991 = vmul.f32 %v983, %v988
        %v992 = vadd.f32 %v990, %v976
        %v993 = vadd.f32 %v991, %v979
        %994 = vst [vmem:[#allocation5] sm:$0xff] %v992
        %995 = vst [vmem:[#allocation5 + $0x8] sm:$0xff] %v993
        // Predicated region
        $region57: #{tpu_custom_call.1} parent=43 // pred_check
          %p996 = pneg %p415
        $region58: #{tpu_custom_call.1} parent=43 // pred_check_branch
          %998 = sbr.rel (%p996) target = $region60
        $region59: #{tpu_custom_call.1} parent=43 // pred_region
          %v999 = vld [vmem:[%s386] sm:$0xff]
          %v1000 = vld [vmem:[%s386 + $0x8] sm:$0xff]
          %v1001 = vld [vmem:[#allocation5] sm:$0xff]
          %v1002 = vld [vmem:[#allocation5 + $0x8] sm:$0xff]
          %s1003 = sld [smem:[#allocation7 + %s38]]
          %v1004 = vld [vmem:[#allocation4] sm:$0x1]
          %v1005 = vstv %s1003
          %v1006 = vrcp.pop %v1004
          %v1007 = vmul.f32 %v1005, %v1006
          %v1009 = vlaneseq
          %v1010 = vshrl.u32 %v1009, 7
          %v1011 = vsub.s32 0, %v1010
          %v1012 = vrot.slane %v1007, %v1011
          %v1014 = vmul.f32 %v1001, %v1012
          %v1015 = vmul.f32 %v1002, %v1012
          %v1016 = vadd.f32 %v999, %v1014
          %v1017 = vadd.f32 %v1000, %v1015
          %1018 = vst [vmem:[%s386] sm:$0xff] %v1016
          %1019 = vst [vmem:[%s386 + $0x8] sm:$0xff] %v1017
        $region60: #{tpu_custom_call.1} parent=43 // pred_fallthru
          _
        %s1020 = sand.u32 %s238, 1
        %s1021 = scalar_lea.sflag [#allocation10], %s1020
        %s1022 = sand.u32 %s238, 1
        %s1023 = smul.addr %s1022, 16
        %s1024 = scalar_lea.vmem [#allocation11], %s1023
        // Predicated region
        $region61: #{tpu_custom_call.1} parent=43 // pred_check
          %p1025 = pneg %p248
        $region62: #{tpu_custom_call.1} parent=43 // pred_check_branch
          %1027 = sbr.rel (%p1025) target = $region64
        $region63: #{tpu_custom_call.1} parent=43 // pred_region
          %s1029 = ssub.s32 256, 256
          %1030 = vsyncadd %s1021, %s1029
          %s1031 = smul.addr %s36, 2
          %s1032 = sadd.s32 %s37, %s1031
          %s1033 = smul.addr %s1032, 128
          %s1034 = scalar_lea.hbm %s7, %s1033
          %s1035 = sshll.u32 %s1024, 4
          %s1036 = int_to_ptr.vmem [resolvable:$true] %s1035
          %1041 = dma.vmem_to_hbm [thread:$0]  %s1036, 256, %s1034, %s1021, 128, 128, 8
        $region64: #{tpu_custom_call.1} parent=43 // pred_fallthru
          _
      $region44: #{tpu_custom_call.1} parent=5 // pred_fallthru
        _
      %p1042 = scmp.le.s32.totalorder 2, %s25
      // Predicated region
      $region65: #{tpu_custom_call.1} parent=5 // pred_check
        %p1043 = pneg %p1042
      $region66: #{tpu_custom_call.1} parent=5 // pred_check_branch
        %1045 = sbr.rel (%p1043) target = $region68
      $region67: #{tpu_custom_call.1} parent=5 // pred_region
        %s1046 = ssub.s32 %s25, 2
        // Predicated region
        $region69: #{tpu_custom_call.1} parent=67 // pred_check
          %p1047 = pneg %p254
        $region70: #{tpu_custom_call.1} parent=67 // pred_check_branch
          %1049 = sbr.rel (%p1047) target = $region72
        $region71: #{tpu_custom_call.1} parent=67 // pred_region
          %s1050 = sand.u32 %s239, 1
          %s1051 = scalar_lea.sflag [#allocation10], %s1050
          %s1052 = sand.u32 %s239, 1
          %s1053 = smul.addr %s1052, 16
          %s1054 = scalar_lea.vmem [#allocation11], %s1053
          %1055 = dma.done %s1051, 256
        $region72: #{tpu_custom_call.1} parent=67 // pred_fallthru
          _
      $region68: #{tpu_custom_call.1} parent=5 // pred_fallthru
        _
    $region6: #{tpu_custom_call.1} parent=1 // loop_footer
      %s29 = sadd.s32 1, %s25
    $region7: #{tpu_custom_call.1} parent=1 // loop_footer_branch
      %24 = sbr.rel target = $region3
    $region8: #{tpu_custom_call.1} parent=1 // loop_exit
      _
    %1056 = vsyncpa [#allocation9], 1
    %s1057 = scalar_lea.sflag [#allocation9], 1
    %1058 = vsyncpa %s1057, 1
    %1059 = vsyncpa [#allocation10], 1
    %s1060 = scalar_lea.sflag [#allocation10], 1
    %1061 = vsyncpa %s1060, 1

</llo_original>
